<compile_context>
chip_gen: v6e
topology: v6e:2x2x1
jax: 0.10.0
libtpu: 0.0.40
codegen_flags: <defaults>
</compile_context>

<pallas_src>
import jax
import jax.numpy as jnp
from jax.experimental import pallas as pl
from jax.experimental.pallas import tpu as pltpu


def _round_up(n, m):
    return ((n + m - 1) // m) * m


def _pick_hid_chunk(d_hid, cap):
    """Largest multiple of 128 dividing d_hid that is <= cap (else full d_hid)."""
    if d_hid <= cap:
        return d_hid
    c = (cap // 128) * 128
    while c >= 128:
        if d_hid % c == 0:
            return c
        c -= 128
    # TODO(synk): pad d_hid for widths with no 128-multiple divisor <= cap.
    return d_hid


def _encoder_stack_kernel(x_ref, w1_ref, b1_ref, w2_ref, p_ref, o_ref,
                          act_sc, y_sc):
    """One (row-tile, layer, d_hid-chunk) grid step of the shared encoder stack.

    x_ref : (tm, 1)      raw input scalars (the value F.pad puts in channel 0)
    w1_ref: (d_in, tk)   W1[l][:, k-chunk]      (bf16)
    b1_ref: (1, tk)      b1[l][k-chunk]         (f32)
    w2_ref: (tk, d_in)   W2[l][k-chunk, :]      (bf16)
    p_ref : (3, d_in)    rows = (b2[l], gamma[l], beta[l])  (f32)
    o_ref : (tm, 1)      per-row feature sum (written only on the last step)
    act_sc: (tm, d_in)   f32 activation carry across layers (also the residual)
    y_sc  : (tm, d_in)   f32 accumulator for w2(relu(w1(x))) across d_hid chunks
    """
    l = pl.program_id(1)
    k = pl.program_id(2)
    nl = pl.num_programs(1)
    nk = pl.num_programs(2)

    # Layer 0, chunk 0: build the embedded input [scalar, 0, ..., 0] directly in
    # VMEM (input.unsqueeze(-1) + F.pad(..., feature_dim-1) never touches HBM).
    @pl.when((l == 0) & (k == 0))
    def _():
        col = jax.lax.broadcasted_iota(jnp.int32, act_sc.shape, 1)
        act_sc[...] = jnp.where(col == 0, x_ref[...], 0.0)

    # Start of a layer's d_hid loop: zero the FFN accumulator.
    @pl.when(k == 0)
    def _():
        y_sc[...] = jnp.zeros_like(y_sc)

    act = act_sc[...]                                   # (tm, d_in) f32 layer input
    mm_dtype = w1_ref.dtype                             # bf16 matmul inputs

    # h_k = relu(x @ W1[:, k] + b1[k])   (MXU, f32 accumulation)
    h = jnp.dot(act.astype(mm_dtype), w1_ref[...],
                preferred_element_type=jnp.float32)     # (tm, tk)
    h = jnp.maximum(h + b1_ref[...], 0.0)

    # y += h_k @ W2[k, :]
    y_sc[...] += jnp.dot(h.astype(mm_dtype), w2_ref[...],
                         preferred_element_type=jnp.float32)

    # Layer epilogue: bias + dropout(identity, eval) + residual + LayerNorm.
    # TODO(synk): nn.Dropout has no Pallas equivalent at inference; identity.
    @pl.when(k == nk - 1)
    def _():
        y = y_sc[...] + p_ref[0:1, :] + act             # + b2 + residual
        mean = jnp.mean(y, axis=-1, keepdims=True)
        var = jnp.mean(jnp.square(y - mean), axis=-1, keepdims=True)
        y = (y - mean) * jax.lax.rsqrt(var + 1e-6)      # eps = 1e-6 (biased var)
        act_sc[...] = y * p_ref[1:2, :] + p_ref[2:3, :]  # * gamma + beta

    # Last layer: emit only the per-row feature sum (the full activation stays
    # in VMEM; downstream consumes only the row sums / cosine similarity).
    @pl.when((l == nl - 1) & (k == nk - 1))
    def _():
        o_ref[...] = jnp.sum(act_sc[...], axis=-1, keepdims=True).astype(o_ref.dtype)


def encoder_stack_rowsums(x_col, w1, b1, w2, pvec, *, tile_m=1024,
                          min_row_tiles=1, hid_chunk=1024):
    """Run n_layers of (NoAttention -> PositionwiseFeedForward) on rows whose
    channel-0 value is x_col (all other channels start at 0), and return the
    per-row sum over the feature dim.

    x_col: [N, 1] f32 raw scalars.  Weights stacked over layers, stored (in, out):
      w1 [L, d_in, d_hid] (bf16), b1 [L, 1, d_hid] f32,
      w2 [L, d_hid, d_in] (bf16), pvec [L, 3, d_in] f32 = (b2, gamma, beta).
    Returns [N, 1] f32 row sums.
    """
    N = x_col.shape[0]
    L, d_in, d_hid = w1.shape

    # K-tiling over d_hid so full W1/W2 need not be VMEM-resident (v7x).
    tk = _pick_hid_chunk(d_hid, hid_chunk)
    nk = d_hid // tk

    # Row tile: big enough to be weight-streaming compute-bound on v6e; pad
    # ragged N instead of asserting divisibility.
    tm = min(tile_m, _round_up(max(N, 8), 8))
    if min_row_tiles > 1 and N >= 8 * min_row_tiles:
        # v7x: guarantee >= min_row_tiles row tiles so both TensorCores work.
        tm = min(tm, _round_up((N + min_row_tiles - 1) // min_row_tiles, 8))
    n_pad = _round_up(N, tm)
    if n_pad != N:
        x_col = jnp.pad(x_col, ((0, n_pad - N), (0, 0)))

    row_tiles = n_pad // tm
    grid = (row_tiles, L, nk)

    wbytes = w1.dtype.itemsize
    lane = 128
    # VMEM footprint of one pipeline stage (double-buffered inputs/outputs,
    # sublane/lane padding included) + scratch + the h intermediate.
    footprint = (
        2 * tm * lane * 4            # x blocks (lane-padded)
        + 2 * tm * lane * 4          # out blocks
        + 2 * d_in * tk * wbytes     # W1 chunk, double-buffered
        + 2 * tk * d_in * wbytes     # W2 chunk, double-buffered
        + 2 * 8 * tk * 4             # b1 chunk (sublane-padded)
        + 2 * 8 * d_in * 4           # packed b2/gamma/beta
        + 2 * tm * d_in * 4          # act_sc + y_sc scratch
        + tm * tk * 4                # h intermediate
    )
    # Cap well below v7x's 64 MiB per-TensorCore VMEM.
    vmem_limit = int(min(max(2 * footprint + (8 << 20), 16 << 20), 48 << 20))

    cost = pl.CostEstimate(
        flops=4 * n_pad * L * d_in * d_hid,              # two matmuls per layer
        transcendentals=n_pad * L,                       # rsqrt per row per layer
        bytes_accessed=(2 * n_pad * 4                    # x scalars in + row sums out
                        + row_tiles * 2 * L * d_in * d_hid * wbytes  # W1+W2 per row tile
                        + row_tiles * L * (d_hid + 3 * d_in) * 4),   # b1 + packed params
    )

    out = pl.pallas_call(
        _encoder_stack_kernel,
        out_shape=jax.ShapeDtypeStruct((n_pad, 1), jnp.float32),
        grid_spec=pltpu.PrefetchScalarGridSpec(
            num_scalar_prefetch=0,
            grid=grid,
            in_specs=[
                pl.BlockSpec((tm, 1), lambda i, l, k: (i, 0)),              # raw scalars
                pl.BlockSpec((None, d_in, tk), lambda i, l, k: (l, 0, k)),  # W1[l] chunk
                pl.BlockSpec((None, 1, tk), lambda i, l, k: (l, 0, k)),     # b1[l] chunk
                pl.BlockSpec((None, tk, d_in), lambda i, l, k: (l, k, 0)),  # W2[l] chunk
                pl.BlockSpec((None, 3, d_in), lambda i, l, k: (l, 0, 0)),   # b2/gamma/beta
            ],
            out_specs=pl.BlockSpec((tm, 1), lambda i, l, k: (i, 0)),        # row sums
            scratch_shapes=[
                pltpu.VMEM((tm, d_in), jnp.float32),   # activation carry
                pltpu.VMEM((tm, d_in), jnp.float32),   # FFN accumulator
            ],
        ),
        compiler_params=pltpu.CompilerParams(
            dimension_semantics=("parallel", "arbitrary", "arbitrary"),
            vmem_limit_bytes=vmem_limit,
        ),
        cost_estimate=cost,
    )(x_col, w1, b1, w2, pvec)

    return out[:N]


def siamese_attention_net_forward(input1, input2, params, *, tile_m=1024,
                                  min_row_tiles=1, hid_chunk=1024):
    """SiameseAttentionNet.forward with att_type='NoAttention'.

    input1, input2: [B, S] f32.  params = (w1, b1, w2, b2, gamma, beta), stacked
    over layers and shared between the two branches (like the PyTorch layer_stack).
    Weights stored (in, out).  Returns (output1 [B,S], output2 [B,S],
    similarity [B], attn_list1, attn_list2).
    """
    w1, b1, w2, b2, gamma, beta = params
    n_layers = w1.shape[0]
    B, S = input1.shape

    # Pack the three per-layer d_in vectors into one pipelined stream.
    pvec = jnp.concatenate([b2, gamma, beta], axis=1)          # [L, 3, d_in]

    # Only the raw scalars go to the kernel; the unsqueeze(-1)+F.pad embedding
    # (99% zeros) is built in VMEM inside the kernel.  Shared siamese weights:
    # both branches run in one pass so weights stream from HBM once.
    x_all = jnp.concatenate([input1.reshape(-1), input2.reshape(-1)])[:, None]

    sums = encoder_stack_rowsums(x_all, w1, b1, w2, pvec, tile_m=tile_m,
                                 min_row_tiles=min_row_tiles, hid_chunk=hid_chunk)

    out1 = sums[: B * S, 0].reshape(B, S)
    out2 = sums[B * S:, 0].reshape(B, S)

    # F.cosine_similarity(dim=-1, eps=1e-8): denominator clamp on the product.
    eps = 1e-8
    dot = jnp.sum(out1 * out2, axis=-1)
    n1 = jnp.sqrt(jnp.sum(out1 * out1, axis=-1))
    n2 = jnp.sqrt(jnp.sum(out2 * out2, axis=-1))
    similarity = dot / jnp.maximum(n1 * n2, eps)

    # att_type='NoAttention' -> enc_slf_attn is None for every layer.
    # TODO(synk): 'SelfAttention'/'ExternalAttention' branches require the
    # ScaledDotProductAttention / ExternalAttention classes, not in the spec.
    attn_list1 = [None] * n_layers
    attn_list2 = [None] * n_layers
    return out1, out2, similarity, attn_list1, attn_list2


if __name__ == "__main__":
    # Small deterministic config; feature_dim lane-dense (128), 2 shared encoder layers.
    B, S = 2, 16
    feature_dim, hidden_dim = 128, 256
    n_layers = 2

    key = jax.random.PRNGKey(0)
    k_in1, k_in2, k_w1, k_b1, k_w2, k_b2, k_g, k_bt = jax.random.split(key, 8)

    input1 = jax.random.normal(k_in1, (B, S), dtype=jnp.float32)
    input2 = jax.random.normal(k_in2, (B, S), dtype=jnp.float32)

    # Per-layer weights stacked along a layer axis, stored (in, out) so the kernel
    # computes x @ W.  Matmul operands bf16, biases / LayerNorm params f32.
    # NOTE: bf16 matmul inputs are a deliberate (documented) numerics deviation
    # from the all-f32 PyTorch module; pass f32 weights for bit-closer results.
    w1 = (0.1 * jax.random.normal(k_w1, (n_layers, feature_dim, hidden_dim),
                                  dtype=jnp.float32)).astype(jnp.bfloat16)
    b1 = 0.1 * jax.random.normal(k_b1, (n_layers, 1, hidden_dim), dtype=jnp.float32)
    w2 = (0.1 * jax.random.normal(k_w2, (n_layers, hidden_dim, feature_dim),
                                  dtype=jnp.float32)).astype(jnp.bfloat16)
    b2 = 0.1 * jax.random.normal(k_b2, (n_layers, 1, feature_dim), dtype=jnp.float32)
    gamma = 1.0 + 0.1 * jax.random.normal(k_g, (n_layers, 1, feature_dim), dtype=jnp.float32)
    beta = 0.1 * jax.random.normal(k_bt, (n_layers, 1, feature_dim), dtype=jnp.float32)
    params = (w1, b1, w2, b2, gamma, beta)

    out1, out2, sim, attn1, attn2 = siamese_attention_net_forward(input1, input2, params)
    jax.block_until_ready((out1, out2, sim))

    # ---- Pure-JAX reference (identical bf16 matmul inputs / f32 accumulate) ----
    def embed(x):
        e = jnp.zeros((B, S, feature_dim), x.dtype)
        return e.at[..., 0].set(x)

    def ref_stack(x2d):
        act = x2d.astype(jnp.float32)
        for l in range(n_layers):
            h = jnp.dot(act.astype(jnp.bfloat16), w1[l],
                        preferred_element_type=jnp.float32)
            h = jnp.maximum(h + b1[l], 0.0)
            y = jnp.dot(h.astype(jnp.bfloat16), w2[l],
                        preferred_element_type=jnp.float32)
            y = y + b2[l] + act
            mu = jnp.mean(y, axis=-1, keepdims=True)
            var = jnp.mean(jnp.square(y - mu), axis=-1, keepdims=True)
            act = (y - mu) * jax.lax.rsqrt(var + 1e-6) * gamma[l] + beta[l]
        return act

    r1 = ref_stack(embed(input1).reshape(B * S, feature_dim)).reshape(B, S, feature_dim).sum(-1)
    r2 = ref_stack(embed(input2).reshape(B * S, feature_dim)).reshape(B, S, feature_dim).sum(-1)
    rdot = jnp.sum(r1 * r2, -1)
    rn1 = jnp.sqrt(jnp.sum(r1 * r1, -1))
    rn2 = jnp.sqrt(jnp.sum(r2 * r2, -1))
    rsim = rdot / jnp.maximum(rn1 * rn2, 1e-8)

    assert jnp.allclose(out1, r1, atol=1e-2, rtol=1e-2), "output1 mismatch vs reference"
    assert jnp.allclose(out2, r2, atol=1e-2, rtol=1e-2), "output2 mismatch vs reference"
    assert jnp.allclose(sim, rsim, atol=1e-2, rtol=1e-2), "similarity mismatch vs reference"

    print("KERNEL_OK")
</pallas_src>

<mosaic_0001>
module attributes {stable_mosaic.version = 11 : i64} {
  func.func @_encoder_stack_kernel(%arg0: i32, %arg1: i32, %arg2: i32, %arg3: memref<64x1xf32, #tpu.memory_space<vmem>>, %arg4: memref<1x128x256xbf16, #tpu.memory_space<vmem>>, %arg5: memref<1x1x256xf32, #tpu.memory_space<vmem>>, %arg6: memref<1x256x128xbf16, #tpu.memory_space<vmem>>, %arg7: memref<1x3x128xf32, #tpu.memory_space<vmem>>, %arg8: memref<64x1xf32, #tpu.memory_space<vmem>>, %arg9: memref<64x128xf32, #tpu.memory_space<vmem>>, %arg10: memref<64x128xf32, #tpu.memory_space<vmem>>) attributes {dimension_semantics = [#tpu.dimension_semantics<parallel>, #tpu.dimension_semantics<arbitrary>, #tpu.dimension_semantics<arbitrary>], iteration_bounds = array<i64: 1, 2, 1>, scalar_prefetch = 0 : i64, scratch_operands = 2 : i64, tpu.core_type = #tpu.core_type<tc>, window_params = [{transform_indices = @transform_0, window_bounds = array<i64: 64, 1>}, {transform_indices = @transform_1, window_bounds = array<i64: 1, 128, 256>}, {transform_indices = @transform_2, window_bounds = array<i64: 1, 1, 256>}, {transform_indices = @transform_3, window_bounds = array<i64: 1, 256, 128>}, {transform_indices = @transform_4, window_bounds = array<i64: 1, 3, 128>}, {transform_indices = @transform_5, window_bounds = array<i64: 64, 1>}]} {
    %c0_i32 = arith.constant 0 : i32
    %0 = arith.cmpi eq, %arg1, %c0_i32 : i32
    %c0_i32_0 = arith.constant 0 : i32
    %1 = arith.cmpi eq, %arg2, %c0_i32_0 : i32
    %2 = arith.andi %0, %1 : i1
    %3 = arith.extui %2 : i1 to i32
    %c0_i32_1 = arith.constant 0 : i32
    %4 = arith.cmpi ne, %3, %c0_i32_1 : i32
    scf.if %4 {
      %34 = tpu.iota {dimensions = array<i32: 1>} : vector<64x128xi32>
      %c0_i32_24 = arith.constant 0 : i32
      %35 = vector.broadcast %c0_i32_24 : i32 to vector<64x128xi32>
      %36 = arith.cmpi eq, %34, %35 : vector<64x128xi32>
      %c0_25 = arith.constant 0 : index
      %c0_26 = arith.constant 0 : index
      %37 = vector.load %arg3[%c0_25, %c0_26] : memref<64x1xf32, #tpu.memory_space<vmem>>, vector<64x1xf32>
      %cst_27 = arith.constant 0.000000e+00 : f32
      %38 = vector.shape_cast %37 : vector<64x1xf32> to vector<64x1xf32>
      %39 = vector.broadcast %38 : vector<64x1xf32> to vector<64x128xf32>
      %40 = vector.broadcast %cst_27 : f32 to vector<64x128xf32>
      %41 = arith.select %36, %39, %40 : vector<64x128xi1>, vector<64x128xf32>
      %c0_28 = arith.constant 0 : index
      %c0_29 = arith.constant 0 : index
      %42 = vector.load %arg9[%c0_28, %c0_29] : memref<64x128xf32, #tpu.memory_space<vmem>>, vector<64x128xf32>
      tpu.vector_store %arg9[%c0_28, %c0_29], %41 {strides = array<i32>} : memref<64x128xf32, #tpu.memory_space<vmem>>, vector<64x128xf32>,
    } else {
    }
    %c0_i32_2 = arith.constant 0 : i32
    %5 = arith.cmpi eq, %arg2, %c0_i32_2 : i32
    %6 = arith.extui %5 : i1 to i32
    %c0_i32_3 = arith.constant 0 : i32
    %7 = arith.cmpi ne, %6, %c0_i32_3 : i32
    scf.if %7 {
      %cst_24 = arith.constant 0.000000e+00 : f32
      %34 = vector.broadcast %cst_24 : f32 to vector<64x128xf32>
      %c0_25 = arith.constant 0 : index
      %c0_26 = arith.constant 0 : index
      %35 = vector.load %arg10[%c0_25, %c0_26] : memref<64x128xf32, #tpu.memory_space<vmem>>, vector<64x128xf32>
      tpu.vector_store %arg10[%c0_25, %c0_26], %34 {strides = array<i32>} : memref<64x128xf32, #tpu.memory_space<vmem>>, vector<64x128xf32>,
    } else {
    }
    %c0 = arith.constant 0 : index
    %c0_4 = arith.constant 0 : index
    %8 = vector.load %arg9[%c0, %c0_4] : memref<64x128xf32, #tpu.memory_space<vmem>>, vector<64x128xf32>
    %9 = arith.truncf %8 : vector<64x128xf32> to vector<64x128xbf16>
    %c0_5 = arith.constant 0 : index
    %c0_6 = arith.constant 0 : index
    %c0_7 = arith.constant 0 : index
    %10 = vector.load %arg4[%c0_5, %c0_6, %c0_7] : memref<1x128x256xbf16, #tpu.memory_space<vmem>>, vector<1x128x256xbf16>
    %11 = vector.shape_cast %10 : vector<1x128x256xbf16> to vector<128x256xbf16>
    %cst = arith.constant dense<0.000000e+00> : vector<64x256xf32>
    %12 = tpu.matmul %9, %11, %cst {dimension_numbers = #tpu.dot_dimension_numbers<[1], [0], [0], [1], [0, 0, 1, 1], [], []>} : vector<64x128xbf16>, vector<128x256xbf16>, vector<64x256xf32> -> vector<64x256xf32>
    %c0_8 = arith.constant 0 : index
    %c0_9 = arith.constant 0 : index
    %c0_10 = arith.constant 0 : index
    %13 = vector.load %arg5[%c0_8, %c0_9, %c0_10] : memref<1x1x256xf32, #tpu.memory_space<vmem>>, vector<1x1x256xf32>
    %14 = vector.shape_cast %13 : vector<1x1x256xf32> to vector<1x256xf32>
    %15 = vector.broadcast %14 : vector<1x256xf32> to vector<64x256xf32>
    %16 = arith.addf %12, %15 : vector<64x256xf32>
    %cst_11 = arith.constant 0.000000e+00 : f32
    %17 = vector.broadcast %cst_11 : f32 to vector<64x256xf32>
    %18 = arith.maximumf %16, %17 : vector<64x256xf32>
    %c0_12 = arith.constant 0 : index
    %c0_13 = arith.constant 0 : index
    %19 = vector.load %arg10[%c0_12, %c0_13] : memref<64x128xf32, #tpu.memory_space<vmem>>, vector<64x128xf32>
    %20 = arith.truncf %18 : vector<64x256xf32> to vector<64x256xbf16>
    %c0_14 = arith.constant 0 : index
    %c0_15 = arith.constant 0 : index
    %c0_16 = arith.constant 0 : index
    %21 = vector.load %arg6[%c0_14, %c0_15, %c0_16] : memref<1x256x128xbf16, #tpu.memory_space<vmem>>, vector<1x256x128xbf16>
    %22 = vector.shape_cast %21 : vector<1x256x128xbf16> to vector<256x128xbf16>
    %cst_17 = arith.constant dense<0.000000e+00> : vector<64x128xf32>
    %23 = tpu.matmul %20, %22, %cst_17 {dimension_numbers = #tpu.dot_dimension_numbers<[1], [0], [0], [1], [0, 0, 1, 1], [], []>} : vector<64x256xbf16>, vector<256x128xbf16>, vector<64x128xf32> -> vector<64x128xf32>
    %24 = arith.addf %19, %23 : vector<64x128xf32>
    %c0_18 = arith.constant 0 : index
    %c0_19 = arith.constant 0 : index
    %25 = vector.load %arg10[%c0_18, %c0_19] : memref<64x128xf32, #tpu.memory_space<vmem>>, vector<64x128xf32>
    tpu.vector_store %arg10[%c0_18, %c0_19], %24 {strides = array<i32>} : memref<64x128xf32, #tpu.memory_space<vmem>>, vector<64x128xf32>,
    %c0_i32_20 = arith.constant 0 : i32
    %26 = arith.cmpi eq, %arg2, %c0_i32_20 : i32
    %27 = arith.extui %26 : i1 to i32
    %c0_i32_21 = arith.constant 0 : i32
    %28 = arith.cmpi ne, %27, %c0_i32_21 : i32
    scf.if %28 {
      %c0_24 = arith.constant 0 : index
      %c0_25 = arith.constant 0 : index
      %34 = vector.load %arg10[%c0_24, %c0_25] : memref<64x128xf32, #tpu.memory_space<vmem>>, vector<64x128xf32>
      %c0_26 = arith.constant 0 : index
      %c0_27 = arith.constant 0 : index
      %c0_28 = arith.constant 0 : index
      %35 = vector.load %arg7[%c0_26, %c0_27, %c0_28] : memref<1x3x128xf32, #tpu.memory_space<vmem>>, vector<1x1x128xf32>
      %36 = vector.shape_cast %35 : vector<1x1x128xf32> to vector<1x128xf32>
      %37 = vector.broadcast %36 : vector<1x128xf32> to vector<64x128xf32>
      %38 = arith.addf %34, %37 : vector<64x128xf32>
      %39 = arith.addf %38, %8 : vector<64x128xf32>
      %cst_29 = arith.constant dense<0.000000e+00> : vector<64xf32>
      %40 = vector.multi_reduction <add>, %39, %cst_29 [1] : vector<64x128xf32> to vector<64xf32>
      %41 = vector.shape_cast %40 : vector<64xf32> to vector<64x1xf32>
      %cst_30 = arith.constant 1.280000e+02 : f32
      %42 = vector.broadcast %cst_30 : f32 to vector<64x1xf32>
      %43 = arith.divf %41, %42 : vector<64x1xf32>
      %44 = vector.broadcast %43 : vector<64x1xf32> to vector<64x128xf32>
      %45 = arith.subf %39, %44 : vector<64x128xf32>
      %46 = arith.mulf %45, %45 : vector<64x128xf32>
      %cst_31 = arith.constant dense<0.000000e+00> : vector<64xf32>
      %47 = vector.multi_reduction <add>, %46, %cst_31 [1] : vector<64x128xf32> to vector<64xf32>
      %48 = vector.shape_cast %47 : vector<64xf32> to vector<64x1xf32>
      %cst_32 = arith.constant 1.280000e+02 : f32
      %49 = vector.broadcast %cst_32 : f32 to vector<64x1xf32>
      %50 = arith.divf %48, %49 : vector<64x1xf32>
      %51 = vector.broadcast %43 : vector<64x1xf32> to vector<64x128xf32>
      %52 = arith.subf %39, %51 : vector<64x128xf32>
      %cst_33 = arith.constant 9.99999997E-7 : f32
      %53 = vector.broadcast %cst_33 : f32 to vector<64x1xf32>
      %54 = arith.addf %50, %53 : vector<64x1xf32>
      %55 = math.rsqrt %54 : vector<64x1xf32>
      %56 = vector.broadcast %55 : vector<64x1xf32> to vector<64x128xf32>
      %57 = arith.mulf %52, %56 : vector<64x128xf32>
      %c0_34 = arith.constant 0 : index
      %c1 = arith.constant 1 : index
      %c0_35 = arith.constant 0 : index
      %58 = vector.load %arg7[%c0_34, %c1, %c0_35] : memref<1x3x128xf32, #tpu.memory_space<vmem>>, vector<1x1x128xf32>
      %59 = vector.shape_cast %58 : vector<1x1x128xf32> to vector<1x128xf32>
      %60 = vector.broadcast %59 : vector<1x128xf32> to vector<64x128xf32>
      %61 = arith.mulf %57, %60 : vector<64x128xf32>
      %c0_36 = arith.constant 0 : index
      %c2 = arith.constant 2 : index
      %c0_37 = arith.constant 0 : index
      %62 = vector.load %arg7[%c0_36, %c2, %c0_37] : memref<1x3x128xf32, #tpu.memory_space<vmem>>, vector<1x1x128xf32>
      %63 = vector.shape_cast %62 : vector<1x1x128xf32> to vector<1x128xf32>
      %64 = vector.broadcast %63 : vector<1x128xf32> to vector<64x128xf32>
      %65 = arith.addf %61, %64 : vector<64x128xf32>
      %c0_38 = arith.constant 0 : index
      %c0_39 = arith.constant 0 : index
      %66 = vector.load %arg9[%c0_38, %c0_39] : memref<64x128xf32, #tpu.memory_space<vmem>>, vector<64x128xf32>
      tpu.vector_store %arg9[%c0_38, %c0_39], %65 {strides = array<i32>} : memref<64x128xf32, #tpu.memory_space<vmem>>, vector<64x128xf32>,
    } else {
    }
    %c1_i32 = arith.constant 1 : i32
    %29 = arith.cmpi eq, %arg1, %c1_i32 : i32
    %c0_i32_22 = arith.constant 0 : i32
    %30 = arith.cmpi eq, %arg2, %c0_i32_22 : i32
    %31 = arith.andi %29, %30 : i1
    %32 = arith.extui %31 : i1 to i32
    %c0_i32_23 = arith.constant 0 : i32
    %33 = arith.cmpi ne, %32, %c0_i32_23 : i32
    scf.if %33 {
      %c0_24 = arith.constant 0 : index
      %c0_25 = arith.constant 0 : index
      %34 = vector.load %arg9[%c0_24, %c0_25] : memref<64x128xf32, #tpu.memory_space<vmem>>, vector<64x128xf32>
      %cst_26 = arith.constant dense<0.000000e+00> : vector<64xf32>
      %35 = vector.multi_reduction <add>, %34, %cst_26 [1] : vector<64x128xf32> to vector<64xf32>
      %36 = vector.shape_cast %35 : vector<64xf32> to vector<64x1xf32>
      %c0_27 = arith.constant 0 : index
      %c0_28 = arith.constant 0 : index
      %37 = vector.load %arg8[%c0_27, %c0_28] : memref<64x1xf32, #tpu.memory_space<vmem>>, vector<64x1xf32>
      tpu.vector_store %arg8[%c0_27, %c0_28], %36 {strides = array<i32>} : memref<64x1xf32, #tpu.memory_space<vmem>>, vector<64x1xf32>,
    } else {
    }
    return
  }
  func.func @transform_0(%arg0: i32, %arg1: i32, %arg2: i32) -> (i32, i32) {
    %c0_i32 = arith.constant 0 : i32
    %c0_i32_0 = arith.constant 0 : i32
    return %arg0, %c0_i32 : i32, i32
  }
  func.func @transform_1(%arg0: i32, %arg1: i32, %arg2: i32) -> (i32, i32, i32) {
    %c0_i32 = arith.constant 0 : i32
    %c0_i32_0 = arith.constant 0 : i32
    return %arg1, %c0_i32, %arg2 : i32, i32, i32
  }
  func.func @transform_2(%arg0: i32, %arg1: i32, %arg2: i32) -> (i32, i32, i32) {
    %c0_i32 = arith.constant 0 : i32
    %c0_i32_0 = arith.constant 0 : i32
    return %arg1, %c0_i32, %arg2 : i32, i32, i32
  }
  func.func @transform_3(%arg0: i32, %arg1: i32, %arg2: i32) -> (i32, i32, i32) {
    %c0_i32 = arith.constant 0 : i32
    %c0_i32_0 = arith.constant 0 : i32
    return %arg1, %arg2, %c0_i32 : i32, i32, i32
  }
  func.func @transform_4(%arg0: i32, %arg1: i32, %arg2: i32) -> (i32, i32, i32) {
    %c0_i32 = arith.constant 0 : i32
    %c0_i32_0 = arith.constant 0 : i32
    %c0_i32_1 = arith.constant 0 : i32
    return %arg1, %c0_i32, %c0_i32_0 : i32, i32, i32
  }
  func.func @transform_5(%arg0: i32, %arg1: i32, %arg2: i32) -> (i32, i32) {
    %c0_i32 = arith.constant 0 : i32
    %c0_i32_0 = arith.constant 0 : i32
    return %arg0, %c0_i32 : i32, i32
  }
}

</mosaic_0001>

<llo_original>
// kernel: tpu_custom_call.1
$region0: #{tpu_custom_call.1}
  #allocation0 [shape = 'u32[]', space=smem, size = 0x4, offset = 0x4, fixed_abs, tag = 'smem constant byte address 0x4 - core index']
  #allocation1 [shape = 'u32[144,128]{1,0:T(1,128)}', space=vmem, size = 0x12000, scoped, tag = 'internal scratch']
  #allocation2 [shape = 'f32[64,128]{1,0:T(8,128)}', space=vmem, size = 0x8000, scoped, tag = 'scratch operand']
  #allocation3 [shape = 'f32[64,128]{1,0:T(8,128)}', space=vmem, size = 0x8000, scoped, tag = 'scratch operand']
  %s0 = inlined_call_operand.vmem [shape: f32[64,1], index: 0, kind: input, shape index: {}]
  %s1 = inlined_call_operand.hbm [shape: bf16[2,128,256], index: 1, kind: input, shape index: {}]
  %s2 = inlined_call_operand.vmem [shape: f32[2,1,256], index: 2, kind: input, shape index: {}]
  %s3 = inlined_call_operand.hbm [shape: bf16[2,256,128], index: 3, kind: input, shape index: {}]
  %s4 = inlined_call_operand.vmem [shape: f32[2,3,128], index: 4, kind: input, shape index: {}]
  %s5 = inlined_call_operand.vmem [shape: f32[64,1], index: 5, kind: output, shape index: {}]
  %s6 = sld [smem:[#allocation0]]
  $region77: #{tpu_custom_call.1} parent=0
    _
  %s8 = ssub.s32 1, %s6
  %s9 = scalar_select 0, %s8, %s6
  $region1: #{tpu_custom_call.1} parent=0
    #allocation4 [shape = 'u8[131072]{0}', space=vmem, size = 0x20000, scoped, tag = 'input window, operand 1']
    #allocation5 [shape = 's32[2]{0}', space=sflag, size = 0x8, scoped, tag = 'scoped memory for tpu_custom_call.1']
    #allocation6 [shape = 'u8[131072]{0}', space=vmem, size = 0x20000, scoped, tag = 'input window, operand 3']
    #allocation7 [shape = 's32[2]{0}', space=sflag, size = 0x8, scoped, tag = 'scoped memory for tpu_custom_call.1']
    %10 = vsyncpa [#allocation5], 0
    %s11 = scalar_lea.sflag [#allocation5], 1
    %12 = vsyncpa %s11, 0
    %13 = vsyncpa [#allocation7], 0
    %s14 = scalar_lea.sflag [#allocation7], 1
    %15 = vsyncpa %s14, 0
    loop: start=0, step=1, limit=4
    $region2: #{tpu_custom_call.1} parent=1 // loop_pre_header
      _
    $region3: #{tpu_custom_call.1} parent=1 // loop_header
      %s17 = sphi 0, %s21
      %p18 = scmp.ge.s32.totalorder %s17, 4
      %s24 = sphi 0, %s43
      %s25 = sphi 0, %s39
      %s26 = sphi 0, %s35
      %s27 = sphi 0, %s24
      %s28 = sphi 0, %s25
      %s29 = sphi 0, %s26
      %s30 = sphi 0, %s27
      %s31 = sphi 0, %s28
      %s32 = sphi 0, %s29
      %s46 = sphi 0, %s48
      %s49 = sphi 0, %s46
      %s50 = sphi 0, %s49
      %s66 = sphi 0, %s50
      %s74 = sphi 0, %s76
      %s77 = sphi 0, %s74
      %s78 = sphi 0, %s77
      %s94 = sphi 0, %s78
      %s102 = sphi 0, %s104
      %s105 = sphi 0, %s102
      %s106 = sphi 0, %s105
      %s122 = sphi 0, %s106
      %s130 = sphi 0, %s132
      %s133 = sphi 0, %s130
      %s134 = sphi 0, %s133
      %s150 = sphi 0, %s134
      %s156 = sphi 0, %s158
      %s159 = sphi 0, %s156
      %s160 = sphi 0, %s159
      %s176 = sphi 0, %s160
      %s182 = sphi 0, %s184
      %s185 = sphi 0, %s182
      %s186 = sphi 0, %s185
      %s202 = sphi 0, %s186
    $region4: #{tpu_custom_call.1} parent=1 // loop_header_branch
      %20 = sbr.rel (%p18) target = $region8
    $region5: #{tpu_custom_call.1} parent=1 // loop_body
      %s22 = ssub.s32 %s17, 1
      %s23 = ssub.s32 %s17, 2
      %s33 = sadd.s32 1, %s26
      %p34 = scmp.ge.s32.totalorder %s33, 1
      %s35 = scalar_select %p34, 0, %s33
      %s36 = sadd.s32 1, %s25
      %s37 = scalar_select %p34, %s36, %s25
      %p38 = scmp.ge.s32.totalorder %s37, 2
      %s39 = scalar_select %p38, 0, %s37
      %s40 = sadd.s32 1, %s24
      %s41 = scalar_select %p38, %s40, %s24
      %p42 = scmp.ge.s32.totalorder %s41, 1
      %s43 = scalar_select %p42, 0, %s41
      %s44 = ssub.s32 %s24, %s43
      %p45 = scmp.eq.s32.totalorder %s44, 0
      %s47 = sadd.s32 %s46, 1
      %s48 = scalar_select %p45, %s46, %s47
      %p51 = pneg %p45
      %p52 = scmp.eq.s32.totalorder %s17, 1
      %p53 = por %p51, %p52
      %p54 = scmp.ne.s32.totalorder %s46, %s49
      %p55 = scmp.eq.s32.totalorder %s17, 0
      %p56 = por %p54, %p55
      %p57 = scmp.ne.s32.totalorder %s46, %s49
      %p58 = scmp.eq.s32.totalorder %s22, 1
      %p59 = por %p57, %p58
      %p60 = scmp.ne.s32.totalorder %s49, %s50
      %p61 = scmp.eq.s32.totalorder %s22, 0
      %p62 = por %p60, %p61
      %p63 = scmp.ne.s32.totalorder %s49, %s50
      %p64 = scmp.eq.s32.totalorder %s23, 1
      %p65 = por %p63, %p64
      %p67 = scmp.ne.s32.totalorder %s50, %s66
      %p68 = scmp.eq.s32.totalorder %s23, 0
      %p69 = por %p67, %p68
      %s70 = ssub.s32 %s25, %s39
      %s71 = ssub.s32 %s26, %s35
      %s72 = sor.u32 %s70, %s71
      %p73 = scmp.eq.s32.totalorder %s72, 0
      %s75 = sadd.s32 %s74, 1
      %s76 = scalar_select %p73, %s74, %s75
      %p79 = pneg %p73
      %p80 = scmp.eq.s32.totalorder %s17, 1
      %p81 = por %p79, %p80
      %p82 = scmp.ne.s32.totalorder %s74, %s77
      %p83 = scmp.eq.s32.totalorder %s17, 0
      %p84 = por %p82, %p83
      %p85 = scmp.ne.s32.totalorder %s74, %s77
      %p86 = scmp.eq.s32.totalorder %s22, 1
      %p87 = por %p85, %p86
      %p88 = scmp.ne.s32.totalorder %s77, %s78
      %p89 = scmp.eq.s32.totalorder %s22, 0
      %p90 = por %p88, %p89
      %p91 = scmp.ne.s32.totalorder %s77, %s78
      %p92 = scmp.eq.s32.totalorder %s23, 1
      %p93 = por %p91, %p92
      %p95 = scmp.ne.s32.totalorder %s78, %s94
      %p96 = scmp.eq.s32.totalorder %s23, 0
      %p97 = por %p95, %p96
      %s98 = ssub.s32 %s25, %s39
      %s99 = ssub.s32 %s26, %s35
      %s100 = sor.u32 %s98, %s99
      %p101 = scmp.eq.s32.totalorder %s100, 0
      %s103 = sadd.s32 %s102, 1
      %s104 = scalar_select %p101, %s102, %s103
      %p107 = pneg %p101
      %p108 = scmp.eq.s32.totalorder %s17, 1
      %p109 = por %p107, %p108
      %p110 = scmp.ne.s32.totalorder %s102, %s105
      %p111 = scmp.eq.s32.totalorder %s17, 0
      %p112 = por %p110, %p111
      %p113 = scmp.ne.s32.totalorder %s102, %s105
      %p114 = scmp.eq.s32.totalorder %s22, 1
      %p115 = por %p113, %p114
      %p116 = scmp.ne.s32.totalorder %s105, %s106
      %p117 = scmp.eq.s32.totalorder %s22, 0
      %p118 = por %p116, %p117
      %p119 = scmp.ne.s32.totalorder %s105, %s106
      %p120 = scmp.eq.s32.totalorder %s23, 1
      %p121 = por %p119, %p120
      %p123 = scmp.ne.s32.totalorder %s106, %s122
      %p124 = scmp.eq.s32.totalorder %s23, 0
      %p125 = por %p123, %p124
      %s126 = ssub.s32 %s25, %s39
      %s127 = ssub.s32 %s26, %s35
      %s128 = sor.u32 %s126, %s127
      %p129 = scmp.eq.s32.totalorder %s128, 0
      %s131 = sadd.s32 %s130, 1
      %s132 = scalar_select %p129, %s130, %s131
      %p135 = pneg %p129
      %p136 = scmp.eq.s32.totalorder %s17, 1
      %p137 = por %p135, %p136
      %p138 = scmp.ne.s32.totalorder %s130, %s133
      %p139 = scmp.eq.s32.totalorder %s17, 0
      %p140 = por %p138, %p139
      %p141 = scmp.ne.s32.totalorder %s130, %s133
      %p142 = scmp.eq.s32.totalorder %s22, 1
      %p143 = por %p141, %p142
      %p144 = scmp.ne.s32.totalorder %s133, %s134
      %p145 = scmp.eq.s32.totalorder %s22, 0
      %p146 = por %p144, %p145
      %p147 = scmp.ne.s32.totalorder %s133, %s134
      %p148 = scmp.eq.s32.totalorder %s23, 1
      %p149 = por %p147, %p148
      %p151 = scmp.ne.s32.totalorder %s134, %s150
      %p152 = scmp.eq.s32.totalorder %s23, 0
      %p153 = por %p151, %p152
      %s154 = ssub.s32 %s25, %s39
      %p155 = scmp.eq.s32.totalorder %s154, 0
      %s157 = sadd.s32 %s156, 1
      %s158 = scalar_select %p155, %s156, %s157
      %p161 = pneg %p155
      %p162 = scmp.eq.s32.totalorder %s17, 1
      %p163 = por %p161, %p162
      %p164 = scmp.ne.s32.totalorder %s156, %s159
      %p165 = scmp.eq.s32.totalorder %s17, 0
      %p166 = por %p164, %p165
      %p167 = scmp.ne.s32.totalorder %s156, %s159
      %p168 = scmp.eq.s32.totalorder %s22, 1
      %p169 = por %p167, %p168
      %p170 = scmp.ne.s32.totalorder %s159, %s160
      %p171 = scmp.eq.s32.totalorder %s22, 0
      %p172 = por %p170, %p171
      %p173 = scmp.ne.s32.totalorder %s159, %s160
      %p174 = scmp.eq.s32.totalorder %s23, 1
      %p175 = por %p173, %p174
      %p177 = scmp.ne.s32.totalorder %s160, %s176
      %p178 = scmp.eq.s32.totalorder %s23, 0
      %p179 = por %p177, %p178
      %s180 = ssub.s32 %s24, %s43
      %p181 = scmp.eq.s32.totalorder %s180, 0
      %s183 = sadd.s32 %s182, 1
      %s184 = scalar_select %p181, %s182, %s183
      %p187 = pneg %p181
      %p188 = scmp.eq.s32.totalorder %s17, 1
      %p189 = por %p187, %p188
      %p190 = scmp.ne.s32.totalorder %s182, %s185
      %p191 = scmp.eq.s32.totalorder %s17, 0
      %p192 = por %p190, %p191
      %p193 = scmp.ne.s32.totalorder %s182, %s185
      %p194 = scmp.eq.s32.totalorder %s22, 1
      %p195 = por %p193, %p194
      %p196 = scmp.ne.s32.totalorder %s185, %s186
      %p197 = scmp.eq.s32.totalorder %s22, 0
      %p198 = por %p196, %p197
      %p199 = scmp.ne.s32.totalorder %s185, %s186
      %p200 = scmp.eq.s32.totalorder %s23, 1
      %p201 = por %p199, %p200
      %p203 = scmp.ne.s32.totalorder %s186, %s202
      %p204 = scmp.eq.s32.totalorder %s23, 0
      %p205 = por %p203, %p204
      %p206 = scmp.le.s32.totalorder 1, %s17
      %p207 = scmp.lt.s32.totalorder %s17, 3
      %p208 = pnand %p206, %p207
      %p209 = pneg %p208
      // Predicated region
      $region9: #{tpu_custom_call.1} parent=5 // pred_check
        _
      $region10: #{tpu_custom_call.1} parent=5 // pred_check_branch
        %211 = sbr.rel (%p208) target = $region12
      $region11: #{tpu_custom_call.1} parent=5 // pred_region
        %s212 = ssub.s32 %s17, 1
        // Predicated region
        $region13: #{tpu_custom_call.1} parent=11 // pred_check
          %p213 = pneg %p62
        $region14: #{tpu_custom_call.1} parent=11 // pred_check_branch
          %215 = sbr.rel (%p213) target = $region16
        $region15: #{tpu_custom_call.1} parent=11 // pred_region
          %s216 = smul.u32 8, %s27
          %p217 = scmp.lt.s32.totalorder %s216, 7
          %s218 = scalar_select %p217, %s216, 7
          %s219 = smul.addr %s218, 8
          %s220 = scalar_lea.vmem %s0, %s219
          %s221 = smul.u32 8, %s27
        $region16: #{tpu_custom_call.1} parent=11 // pred_fallthru
          _
      $region12: #{tpu_custom_call.1} parent=5 // pred_fallthru
        _
      %p222 = scmp.lt.s32.totalorder %s17, 2
      // Predicated region
      $region17: #{tpu_custom_call.1} parent=5 // pred_check
        %p223 = pneg %p222
      $region18: #{tpu_custom_call.1} parent=5 // pred_check_branch
        %225 = sbr.rel (%p223) target = $region20
      $region19: #{tpu_custom_call.1} parent=5 // pred_region
        // Predicated region
        $region21: #{tpu_custom_call.1} parent=19 // pred_check
          %p226 = pneg %p84
        $region22: #{tpu_custom_call.1} parent=19 // pred_check_branch
          %228 = sbr.rel (%p226) target = $region24
        $region23: #{tpu_custom_call.1} parent=19 // pred_region
          %s229 = sand.u32 %s74, 1
          %s230 = scalar_lea.sflag [#allocation5], %s229
          %s231 = sand.u32 %s74, 1
          %s232 = smul.addr %s231, 128
          %s233 = scalar_lea.vmem [#allocation4], %s232
          %s234 = smul.u32 2, %s26
          %s236 = ssub.s32 2048, 2048
          %237 = vsyncadd %s230, %s236
          %s238 = smul.addr %s25, 32
          %s239 = sadd.s32 %s234, %s238
          %s240 = smul.addr %s239, 64
          %s241 = scalar_lea.hbm %s1, %s240
          %s242 = sshll.u32 %s233, 4
          %s243 = int_to_ptr.vmem [resolvable:$true] %s242
          %248 = dma.hbm_to_vmem [thread:$0]  %s241, 2048, %s243, %s230, 128, 128, 8
        $region24: #{tpu_custom_call.1} parent=19 // pred_fallthru
          _
        // Predicated region
        $region25: #{tpu_custom_call.1} parent=19 // pred_check
          %p249 = pneg %p112
        $region26: #{tpu_custom_call.1} parent=19 // pred_check_branch
          %251 = sbr.rel (%p249) target = $region28
        $region27: #{tpu_custom_call.1} parent=19 // pred_region
          %s252 = smul.u32 2, %s26
          %p253 = scmp.lt.s32.totalorder %s25, 1
          %s254 = scalar_select %p253, %s25, 1
          %p255 = scmp.lt.s32.totalorder %s252, 1
          %s256 = scalar_select %p255, %s252, 1
          %s257 = smul.addr %s254, 2
          %s258 = sadd.s32 %s256, %s257
          %s259 = scalar_lea.vmem %s2, %s258
          %s260 = smul.u32 2, %s26
        $region28: #{tpu_custom_call.1} parent=19 // pred_fallthru
          _
        // Predicated region
        $region29: #{tpu_custom_call.1} parent=19 // pred_check
          %p261 = pneg %p140
        $region30: #{tpu_custom_call.1} parent=19 // pred_check_branch
          %263 = sbr.rel (%p261) target = $region32
        $region31: #{tpu_custom_call.1} parent=19 // pred_region
          %s264 = sand.u32 %s130, 1
          %s265 = scalar_lea.sflag [#allocation7], %s264
          %s266 = sand.u32 %s130, 1
          %s267 = smul.addr %s266, 128
          %s268 = scalar_lea.vmem [#allocation6], %s267
          %s269 = smul.u32 32, %s26
          %s271 = ssub.s32 2048, 2048
          %272 = vsyncadd %s265, %s271
          %s273 = smul.addr %s25, 32
          %s274 = sadd.s32 %s269, %s273
          %s275 = smul.addr %s274, 64
          %s276 = scalar_lea.hbm %s3, %s275
          %s277 = sshll.u32 %s268, 4
          %s278 = int_to_ptr.vmem [resolvable:$true] %s277
          %283 = dma.hbm_to_vmem [thread:$0]  %s276, 2048, %s278, %s265, 64, 64, 4
        $region32: #{tpu_custom_call.1} parent=19 // pred_fallthru
          _
        // Predicated region
        $region33: #{tpu_custom_call.1} parent=19 // pred_check
          %p284 = pneg %p166
        $region34: #{tpu_custom_call.1} parent=19 // pred_check_branch
          %286 = sbr.rel (%p284) target = $region36
        $region35: #{tpu_custom_call.1} parent=19 // pred_region
          %p287 = scmp.lt.s32.totalorder %s25, 1
          %s288 = scalar_select %p287, %s25, 1
          %s289 = smul.addr %s288, 4
          %s290 = scalar_lea.vmem %s4, %s289
        $region36: #{tpu_custom_call.1} parent=19 // pred_fallthru
          _
      $region20: #{tpu_custom_call.1} parent=5 // pred_fallthru
        _
      %p291 = scmp.le.s32.totalorder 1, %s17
      %p292 = scmp.lt.s32.totalorder %s17, 3
      %p293 = pnand %p291, %p292
      %p294 = pneg %p293
      // Predicated region
      $region37: #{tpu_custom_call.1} parent=5 // pred_check
        _
      $region38: #{tpu_custom_call.1} parent=5 // pred_check_branch
        %296 = sbr.rel (%p293) target = $region40
      $region39: #{tpu_custom_call.1} parent=5 // pred_region
        %s297 = ssub.s32 %s17, 1
        %s298 = sand.u32 %s77, 1
        %s299 = scalar_lea.sflag [#allocation5], %s298
        %s300 = sand.u32 %s77, 1
        %s301 = smul.addr %s300, 128
        %s302 = scalar_lea.vmem [#allocation4], %s301
        // Predicated region
        $region41: #{tpu_custom_call.1} parent=39 // pred_check
          %p303 = pneg %p90
        $region42: #{tpu_custom_call.1} parent=39 // pred_check_branch
          %305 = sbr.rel (%p303) target = $region44
        $region43: #{tpu_custom_call.1} parent=39 // pred_region
          %306 = dma.done %s299, 2048
        $region44: #{tpu_custom_call.1} parent=39 // pred_fallthru
          _
        %s307 = sand.u32 %s133, 1
        %s308 = scalar_lea.sflag [#allocation7], %s307
        %s309 = sand.u32 %s133, 1
        %s310 = smul.addr %s309, 128
        %s311 = scalar_lea.vmem [#allocation6], %s310
        // Predicated region
        $region45: #{tpu_custom_call.1} parent=39 // pred_check
          %p312 = pneg %p146
        $region46: #{tpu_custom_call.1} parent=39 // pred_check_branch
          %314 = sbr.rel (%p312) target = $region48
        $region47: #{tpu_custom_call.1} parent=39 // pred_region
          %315 = dma.done %s308, 2048
        $region48: #{tpu_custom_call.1} parent=39 // pred_fallthru
          _
        %s316 = smul.u32 8, %s27
        %p317 = scmp.lt.s32.totalorder %s316, 7
        %s318 = scalar_select %p317, %s316, 7
        %s319 = smul.addr %s318, 8
        %s320 = scalar_lea.vmem %s0, %s319
        %p321 = pneg %p62
        %p322 = pneg %p59
        %s323 = sand.u32 %s77, 1
        %s324 = scalar_lea.sflag [#allocation5], %s323
        %s325 = sand.u32 %s77, 1
        %s326 = smul.addr %s325, 128
        %s327 = scalar_lea.vmem [#allocation4], %s326
        %p328 = pneg %p90
        %p329 = pneg %p87
        %s330 = smul.u32 2, %s29
        %p331 = scmp.lt.s32.totalorder %s28, 1
        %s332 = scalar_select %p331, %s28, 1
        %p333 = scmp.lt.s32.totalorder %s330, 1
        %s334 = scalar_select %p333, %s330, 1
        %s335 = smul.addr %s332, 2
        %s336 = sadd.s32 %s334, %s335
        %s337 = scalar_lea.vmem %s2, %s336
        %p338 = pneg %p118
        %p339 = pneg %p115
        %s340 = sand.u32 %s133, 1
        %s341 = scalar_lea.sflag [#allocation7], %s340
        %s342 = sand.u32 %s133, 1
        %s343 = smul.addr %s342, 128
        %s344 = scalar_lea.vmem [#allocation6], %s343
        %p345 = pneg %p146
        %p346 = pneg %p143
        %p347 = scmp.lt.s32.totalorder %s28, 1
        %s348 = scalar_select %p347, %s28, 1
        %s349 = smul.addr %s348, 4
        %s350 = scalar_lea.vmem %s4, %s349
        %p351 = pneg %p172
        %p352 = pneg %p169
        %p353 = pneg %p198
        %p354 = pneg %p195
        %s355 = smul.u32 8, %s27
        %p356 = scmp.lt.s32.totalorder %s355, 7
        %s357 = scalar_select %p356, %s355, 7
        %s358 = smul.addr %s357, 8
        %s359 = scalar_lea.vmem %s5, %s358
        %s360 = smul.u32 8, %s27
        %p361 = scmp.lt.s32.totalorder %s360, 7
        %s362 = scalar_select %p361, %s360, 7
        %s363 = smul.addr %s362, 8
        %s364 = scalar_lea.vmem %s0, %s363
        %s365 = smul.u32 8, %s27
        %s366 = smul.u32 2, %s29
        %s367 = smul.u32 2, %s29
        %p368 = scmp.lt.s32.totalorder %s28, 1
        %s369 = scalar_select %p368, %s28, 1
        %p370 = scmp.lt.s32.totalorder %s367, 1
        %s371 = scalar_select %p370, %s367, 1
        %s372 = smul.addr %s369, 2
        %s373 = sadd.s32 %s371, %s372
        %s374 = scalar_lea.vmem %s2, %s373
        %s375 = smul.u32 2, %s29
        %s376 = smul.u32 32, %s29
        %p377 = scmp.lt.s32.totalorder %s28, 1
        %s378 = scalar_select %p377, %s28, 1
        %s379 = smul.addr %s378, 4
        %s380 = scalar_lea.vmem %s4, %s379
        %s381 = smul.u32 8, %s27
        %p382 = scmp.lt.s32.totalorder %s381, 7
        %s383 = scalar_select %p382, %s381, 7
        %s384 = smul.addr %s383, 8
        %s385 = scalar_lea.vmem %s5, %s384
        %s386 = smul.u32 8, %s27
        %p388 = scmp.eq.s32.totalorder %s28, 0
        %p389 = scmp.eq.s32.totalorder %s29, 0
        %p390 = pnand %p388, %p389
        %p391 = pneg %p390
        // Predicated region
        $region49: #{tpu_custom_call.1} parent=39 // pred_check
          _
        $region50: #{tpu_custom_call.1} parent=39 // pred_check_branch
          %393 = sbr.rel (%p390) target = $region52
        $region51: #{tpu_custom_call.1} parent=39 // pred_region
          %v394 = vlaneseq
          %v395 = vand.u32 %v394, 127
          %vm396 = vcmp.eq.s32.totalorder %v395, 0
          %v397 = vld [vmem:[%s364] sm:$0xff]
          %v398 = vld [vmem:[%s364 + $0x8] sm:$0xff]
          %v399 = vld [vmem:[%s364 + $0x10] sm:$0xff]
          %v400 = vld [vmem:[%s364 + $0x18] sm:$0xff]
          %v401 = vld [vmem:[%s364 + $0x20] sm:$0xff]
          %v402 = vld [vmem:[%s364 + $0x28] sm:$0xff]
          %v403 = vld [vmem:[%s364 + $0x30] sm:$0xff]
          %v404 = vld [vmem:[%s364 + $0x38] sm:$0xff]
          %406 = vset.pattern.permute.xlu0 0
          %407 = vperm.xlu0 %406, %v397
          %v408 = vpop.permute.xlu0 %407
          %411 = vset.pattern.permute.xlu0 0
          %412 = vperm.xlu0 %411, %v398
          %v413 = vpop.permute.xlu0 %412
          %416 = vset.pattern.permute.xlu0 0
          %417 = vperm.xlu0 %416, %v399
          %v418 = vpop.permute.xlu0 %417
          %421 = vset.pattern.permute.xlu0 0
          %422 = vperm.xlu0 %421, %v400
          %v423 = vpop.permute.xlu0 %422
          %426 = vset.pattern.permute.xlu0 0
          %427 = vperm.xlu0 %426, %v401
          %v428 = vpop.permute.xlu0 %427
          %431 = vset.pattern.permute.xlu0 0
          %432 = vperm.xlu0 %431, %v402
          %v433 = vpop.permute.xlu0 %432
          %436 = vset.pattern.permute.xlu0 0
          %437 = vperm.xlu0 %436, %v403
          %v438 = vpop.permute.xlu0 %437
          %441 = vset.pattern.permute.xlu0 0
          %442 = vperm.xlu0 %441, %v404
          %v443 = vpop.permute.xlu0 %442
          %v445 = vsel %vm396, %v408, 0.0
          %v446 = vsel %vm396, %v413, 0.0
          %v447 = vsel %vm396, %v418, 0.0
          %v448 = vsel %vm396, %v423, 0.0
          %v449 = vsel %vm396, %v428, 0.0
          %v450 = vsel %vm396, %v433, 0.0
          %v451 = vsel %vm396, %v438, 0.0
          %v452 = vsel %vm396, %v443, 0.0
          %453 = vst [vmem:[#allocation2] sm:$0xff] %v445
          %454 = vst [vmem:[#allocation2 + $0x8] sm:$0xff] %v446
          %455 = vst [vmem:[#allocation2 + $0x10] sm:$0xff] %v447
          %456 = vst [vmem:[#allocation2 + $0x18] sm:$0xff] %v448
          %457 = vst [vmem:[#allocation2 + $0x20] sm:$0xff] %v449
          %458 = vst [vmem:[#allocation2 + $0x28] sm:$0xff] %v450
          %459 = vst [vmem:[#allocation2 + $0x30] sm:$0xff] %v451
          %460 = vst [vmem:[#allocation2 + $0x38] sm:$0xff] %v452
        $region52: #{tpu_custom_call.1} parent=39 // pred_fallthru
          _
        // Predicated region
        $region53: #{tpu_custom_call.1} parent=39 // pred_check
          %p461 = pneg %p389
        $region54: #{tpu_custom_call.1} parent=39 // pred_check_branch
          %463 = sbr.rel (%p461) target = $region56
        $region55: #{tpu_custom_call.1} parent=39 // pred_region
          %464 = vst [vmem:[#allocation3] sm:$0xff] 0.0
          %465 = vst [vmem:[#allocation3 + $0x8] sm:$0xff] 0.0
          %466 = vst [vmem:[#allocation3 + $0x10] sm:$0xff] 0.0
          %467 = vst [vmem:[#allocation3 + $0x18] sm:$0xff] 0.0
          %468 = vst [vmem:[#allocation3 + $0x20] sm:$0xff] 0.0
          %469 = vst [vmem:[#allocation3 + $0x28] sm:$0xff] 0.0
          %470 = vst [vmem:[#allocation3 + $0x30] sm:$0xff] 0.0
          %471 = vst [vmem:[#allocation3 + $0x38] sm:$0xff] 0.0
        $region56: #{tpu_custom_call.1} parent=39 // pred_fallthru
          _
        %v472 = vld [vmem:[#allocation2] sm:$0xff]
        %v473 = vld [vmem:[#allocation2 + $0x8] sm:$0xff]
        %v474 = vld [vmem:[#allocation2 + $0x10] sm:$0xff]
        %v475 = vld [vmem:[#allocation2 + $0x18] sm:$0xff]
        %v476 = vld [vmem:[#allocation2 + $0x20] sm:$0xff]
        %v477 = vld [vmem:[#allocation2 + $0x28] sm:$0xff]
        %v478 = vld [vmem:[#allocation2 + $0x30] sm:$0xff]
        %v479 = vld [vmem:[#allocation2 + $0x38] sm:$0xff]
        %v480 = vpack.c.bf16 %v473, %v472
        %v481 = vpack.c.bf16 %v475, %v474
        %v482 = vpack.c.bf16 %v477, %v476
        %v483 = vpack.c.bf16 %v479, %v478
        %v484 = vld [vmem:[%s302] sm:$0xff]
        %v485 = vld [vmem:[%s302 + $0x8] sm:$0xff]
        %v486 = vld [vmem:[%s302 + $0x10] sm:$0xff]
        %v487 = vld [vmem:[%s302 + $0x18] sm:$0xff]
        %v488 = vld [vmem:[%s302 + $0x20] sm:$0xff]
        %v489 = vld [vmem:[%s302 + $0x28] sm:$0xff]
        %v490 = vld [vmem:[%s302 + $0x30] sm:$0xff]
        %v491 = vld [vmem:[%s302 + $0x38] sm:$0xff]
        %v492 = vld [vmem:[%s302 + $0x40] sm:$0xff]
        %v493 = vld [vmem:[%s302 + $0x48] sm:$0xff]
        %v494 = vld [vmem:[%s302 + $0x50] sm:$0xff]
        %v495 = vld [vmem:[%s302 + $0x58] sm:$0xff]
        %v496 = vld [vmem:[%s302 + $0x60] sm:$0xff]
        %v497 = vld [vmem:[%s302 + $0x68] sm:$0xff]
        %v498 = vld [vmem:[%s302 + $0x70] sm:$0xff]
        %v499 = vld [vmem:[%s302 + $0x78] sm:$0xff]
        %v500 = vld [vmem:[%s374] sm:$0x3]
        %v502 = vlaneseq
        %v503 = vshrl.u32 %v502, 7
        %v504 = vsub.s32 0, %v503
        %v505 = vrot.slane %v500, %v504
        %v506 = vlaneseq
        %v507 = vshrl.u32 %v506, 7
        %v508 = vsub.s32 1, %v507
        %v509 = vrot.slane %v500, %v508
        %v528 = vunpack.c.l.b16 %v484
        %v529 = vunpack.c.h.b16 %v484
        %v530 = vunpack.c.l.b16 %v485
        %v531 = vunpack.c.h.b16 %v485
        %v532 = vunpack.c.l.b16 %v486
        %v533 = vunpack.c.h.b16 %v486
        %v534 = vunpack.c.l.b16 %v487
        %v535 = vunpack.c.h.b16 %v487
        %v536 = vunpack.c.l.b16 %v488
        %v537 = vunpack.c.h.b16 %v488
        %v538 = vunpack.c.l.b16 %v489
        %v539 = vunpack.c.h.b16 %v489
        %v540 = vunpack.c.l.b16 %v490
        %v541 = vunpack.c.h.b16 %v490
        %v542 = vunpack.c.l.b16 %v491
        %v543 = vunpack.c.h.b16 %v491
        %v544 = vunpack.c.l.b16 %v492
        %v545 = vunpack.c.h.b16 %v492
        %v546 = vunpack.c.l.b16 %v493
        %v547 = vunpack.c.h.b16 %v493
        %v548 = vunpack.c.l.b16 %v494
        %v549 = vunpack.c.h.b16 %v494
        %v550 = vunpack.c.l.b16 %v495
        %v551 = vunpack.c.h.b16 %v495
        %v552 = vunpack.c.l.b16 %v496
        %v553 = vunpack.c.h.b16 %v496
        %v554 = vunpack.c.l.b16 %v497
        %v555 = vunpack.c.h.b16 %v497
        %v556 = vunpack.c.l.b16 %v498
        %v557 = vunpack.c.h.b16 %v498
        %v558 = vunpack.c.l.b16 %v499
        %v559 = vunpack.c.h.b16 %v499
        %v560 = vpack.c.b16 %v530, %v528
        %v561 = vpack.c.b16 %v531, %v529
        %v562 = vpack.c.b16 %v534, %v532
        %v563 = vpack.c.b16 %v535, %v533
        %v564 = vpack.c.b16 %v538, %v536
        %v565 = vpack.c.b16 %v539, %v537
        %v566 = vpack.c.b16 %v542, %v540
        %v567 = vpack.c.b16 %v543, %v541
        %v568 = vpack.c.b16 %v546, %v544
        %v569 = vpack.c.b16 %v547, %v545
        %v570 = vpack.c.b16 %v550, %v548
        %v571 = vpack.c.b16 %v551, %v549
        %v572 = vpack.c.b16 %v554, %v552
        %v573 = vpack.c.b16 %v555, %v553
        %v574 = vpack.c.b16 %v558, %v556
        %v575 = vpack.c.b16 %v559, %v557
        %592 = vmatprep.subr.bf16.mxu0 %v575
        %593 = vmatpush1.bf16.msra.mxu0 %v574
        %594 = vmatprep.subr.bf16.mxu0 %v573
        %595 = vmatpush1.bf16.msra.mxu0 %v572
        %596 = vmatprep.subr.bf16.mxu0 %v571
        %597 = vmatpush1.bf16.msra.mxu0 %v570
        %598 = vmatprep.subr.bf16.mxu0 %v569
        %599 = vmatpush1.bf16.msra.mxu0 %v568
        %600 = vmatprep.subr.bf16.mxu0 %v567
        %601 = vmatpush1.bf16.msra.mxu0 %v566
        %602 = vmatprep.subr.bf16.mxu0 %v565
        %603 = vmatpush1.bf16.msra.mxu0 %v564
        %604 = vmatprep.subr.bf16.mxu0 %v563
        %605 = vmatpush1.bf16.msra.mxu0 %v562
        %606 = vmatprep.subr.bf16.mxu0 %v561
        %607 = vmatpush1.bf16.msra.mxu0 %v560
        %608 = vmatprep.subr.bf16.mxu0 0
        %609 = vmatpush2.bf16.msra.mxu0 0
        %610 = vmatprep.subr.bf16.mxu0 0
        %611 = vmatpush2.bf16.msra.mxu0 0
        %612 = vmatprep.subr.bf16.mxu0 0
        %613 = vmatpush2.bf16.msra.mxu0 0
        %614 = vmatprep.subr.bf16.mxu0 0
        %615 = vmatpush2.bf16.msra.mxu0 0
        %616 = vmatprep.subr.bf16.mxu0 0
        %617 = vmatpush2.bf16.msra.mxu0 0
        %618 = vmatprep.subr.bf16.mxu0 0
        %619 = vmatpush2.bf16.msra.mxu0 0
        %620 = vmatprep.subr.bf16.mxu0 0
        %621 = vmatpush2.bf16.msra.mxu0 0
        %622 = vmatprep.subr.bf16.mxu0 0
        %623 = vmatpush2.bf16.msra.mxu0 0
        %624 = vmatprep.mubr.bf16.mxu0 0
        %625 = vmatmul.mubr.bf16.gmra.mxu0 %v480
        %v626 = vpop.f32.mrf.mxu0
        %v627 = vadd.f32 %v505, %v626
        %v628 = vpop.f32.mrf.mxu0
        %v629 = vadd.f32 %v509, %v628
        %v630 = vpop.f32.mrf.mxu0
        %v631 = vadd.f32 %v505, %v630
        %v632 = vpop.f32.mrf.mxu0
        %v633 = vadd.f32 %v509, %v632
        %634 = vmatprep.mubr.bf16.mxu0 0
        %635 = vmatmul.mubr.bf16.gmra.mxu0 %v481
        %v636 = vpop.f32.mrf.mxu0
        %v637 = vadd.f32 %v505, %v636
        %v638 = vpop.f32.mrf.mxu0
        %v639 = vadd.f32 %v509, %v638
        %v640 = vpop.f32.mrf.mxu0
        %v641 = vadd.f32 %v505, %v640
        %v642 = vpop.f32.mrf.mxu0
        %v643 = vadd.f32 %v509, %v642
        %644 = vmatprep.mubr.bf16.mxu0 0
        %645 = vmatmul.mubr.bf16.gmra.mxu0 %v482
        %v646 = vpop.f32.mrf.mxu0
        %v647 = vadd.f32 %v505, %v646
        %v648 = vpop.f32.mrf.mxu0
        %v649 = vadd.f32 %v509, %v648
        %v650 = vpop.f32.mrf.mxu0
        %v651 = vadd.f32 %v505, %v650
        %v652 = vpop.f32.mrf.mxu0
        %v653 = vadd.f32 %v509, %v652
        %654 = vmatprep.mubr.bf16.mxu0 0
        %655 = vmatmul.mubr.bf16.gmra.mxu0 %v483
        %v656 = vpop.f32.mrf.mxu0
        %v657 = vadd.f32 %v505, %v656
        %v658 = vpop.f32.mrf.mxu0
        %v659 = vadd.f32 %v509, %v658
        %v660 = vpop.f32.mrf.mxu0
        %v661 = vadd.f32 %v505, %v660
        %v662 = vpop.f32.mrf.mxu0
        %v663 = vadd.f32 %v509, %v662
        %664 = vdwg.mxu0
        %v665 = vmax.f32 %v627, 0.0
        %v666 = vmax.f32 %v629, 0.0
        %v667 = vmax.f32 %v631, 0.0
        %v668 = vmax.f32 %v633, 0.0
        %v669 = vmax.f32 %v637, 0.0
        %v670 = vmax.f32 %v639, 0.0
        %v671 = vmax.f32 %v641, 0.0
        %v672 = vmax.f32 %v643, 0.0
        %v673 = vmax.f32 %v647, 0.0
        %v674 = vmax.f32 %v649, 0.0
        %v675 = vmax.f32 %v651, 0.0
        %v676 = vmax.f32 %v653, 0.0
        %v677 = vmax.f32 %v657, 0.0
        %v678 = vmax.f32 %v659, 0.0
        %v679 = vmax.f32 %v661, 0.0
        %v680 = vmax.f32 %v663, 0.0
        %v681 = vld [vmem:[#allocation3] sm:$0xff]
        %v682 = vld [vmem:[#allocation3 + $0x8] sm:$0xff]
        %v683 = vld [vmem:[#allocation3 + $0x10] sm:$0xff]
        %v684 = vld [vmem:[#allocation3 + $0x18] sm:$0xff]
        %v685 = vld [vmem:[#allocation3 + $0x20] sm:$0xff]
        %v686 = vld [vmem:[#allocation3 + $0x28] sm:$0xff]
        %v687 = vld [vmem:[#allocation3 + $0x30] sm:$0xff]
        %v688 = vld [vmem:[#allocation3 + $0x38] sm:$0xff]
        %v689 = vpack.c.bf16 %v667, %v665
        %v690 = vpack.c.bf16 %v668, %v666
        %v691 = vpack.c.bf16 %v671, %v669
        %v692 = vpack.c.bf16 %v672, %v670
        %v693 = vpack.c.bf16 %v675, %v673
        %v694 = vpack.c.bf16 %v676, %v674
        %v695 = vpack.c.bf16 %v679, %v677
        %v696 = vpack.c.bf16 %v680, %v678
        %v697 = vld [vmem:[%s311] sm:$0xf]
        %v698 = vld [vmem:[%s311 + $0x4] sm:$0xf]
        %v699 = vld [vmem:[%s311 + $0x8] sm:$0xf]
        %v700 = vld [vmem:[%s311 + $0xc] sm:$0xf]
        %v701 = vld [vmem:[%s311 + $0x10] sm:$0xf]
        %v702 = vld [vmem:[%s311 + $0x14] sm:$0xf]
        %v703 = vld [vmem:[%s311 + $0x18] sm:$0xf]
        %v704 = vld [vmem:[%s311 + $0x1c] sm:$0xf]
        %v705 = vld [vmem:[%s311 + $0x20] sm:$0xf]
        %v706 = vld [vmem:[%s311 + $0x24] sm:$0xf]
        %v707 = vld [vmem:[%s311 + $0x28] sm:$0xf]
        %v708 = vld [vmem:[%s311 + $0x2c] sm:$0xf]
        %v709 = vld [vmem:[%s311 + $0x30] sm:$0xf]
        %v710 = vld [vmem:[%s311 + $0x34] sm:$0xf]
        %v711 = vld [vmem:[%s311 + $0x38] sm:$0xf]
        %v712 = vld [vmem:[%s311 + $0x3c] sm:$0xf]
        %v713 = vld [vmem:[%s311 + $0x40] sm:$0xf]
        %v714 = vld [vmem:[%s311 + $0x44] sm:$0xf]
        %v715 = vld [vmem:[%s311 + $0x48] sm:$0xf]
        %v716 = vld [vmem:[%s311 + $0x4c] sm:$0xf]
        %v717 = vld [vmem:[%s311 + $0x50] sm:$0xf]
        %v718 = vld [vmem:[%s311 + $0x54] sm:$0xf]
        %v719 = vld [vmem:[%s311 + $0x58] sm:$0xf]
        %v720 = vld [vmem:[%s311 + $0x5c] sm:$0xf]
        %v721 = vld [vmem:[%s311 + $0x60] sm:$0xf]
        %v722 = vld [vmem:[%s311 + $0x64] sm:$0xf]
        %v723 = vld [vmem:[%s311 + $0x68] sm:$0xf]
        %v724 = vld [vmem:[%s311 + $0x6c] sm:$0xf]
        %v725 = vld [vmem:[%s311 + $0x70] sm:$0xf]
        %v726 = vld [vmem:[%s311 + $0x74] sm:$0xf]
        %v727 = vld [vmem:[%s311 + $0x78] sm:$0xf]
        %v728 = vld [vmem:[%s311 + $0x7c] sm:$0xf]
        %v761 = vunpack.c.l.b16 %v697
        %v762 = vunpack.c.l.b16 %v698
        %v763 = vunpack.c.l.b16 %v699
        %v764 = vunpack.c.l.b16 %v700
        %v765 = vunpack.c.l.b16 %v701
        %v766 = vunpack.c.l.b16 %v702
        %v767 = vunpack.c.l.b16 %v703
        %v768 = vunpack.c.l.b16 %v704
        %v769 = vunpack.c.l.b16 %v705
        %v770 = vunpack.c.l.b16 %v706
        %v771 = vunpack.c.l.b16 %v707
        %v772 = vunpack.c.l.b16 %v708
        %v773 = vunpack.c.l.b16 %v709
        %v774 = vunpack.c.l.b16 %v710
        %v775 = vunpack.c.l.b16 %v711
        %v776 = vunpack.c.l.b16 %v712
        %v777 = vunpack.c.l.b16 %v713
        %v778 = vunpack.c.l.b16 %v714
        %v779 = vunpack.c.l.b16 %v715
        %v780 = vunpack.c.l.b16 %v716
        %v781 = vunpack.c.l.b16 %v717
        %v782 = vunpack.c.l.b16 %v718
        %v783 = vunpack.c.l.b16 %v719
        %v784 = vunpack.c.l.b16 %v720
        %v785 = vunpack.c.l.b16 %v721
        %v786 = vunpack.c.l.b16 %v722
        %v787 = vunpack.c.l.b16 %v723
        %v788 = vunpack.c.l.b16 %v724
        %v789 = vunpack.c.l.b16 %v725
        %v790 = vunpack.c.l.b16 %v726
        %v791 = vunpack.c.l.b16 %v727
        %v792 = vunpack.c.l.b16 %v728
        %v793 = vpack.c.b16 %v762, %v761
        %v794 = vpack.c.b16 %v764, %v763
        %v795 = vpack.c.b16 %v766, %v765
        %v796 = vpack.c.b16 %v768, %v767
        %v797 = vpack.c.b16 %v770, %v769
        %v798 = vpack.c.b16 %v772, %v771
        %v799 = vpack.c.b16 %v774, %v773
        %v800 = vpack.c.b16 %v776, %v775
        %v801 = vpack.c.b16 %v778, %v777
        %v802 = vpack.c.b16 %v780, %v779
        %v803 = vpack.c.b16 %v782, %v781
        %v804 = vpack.c.b16 %v784, %v783
        %v805 = vpack.c.b16 %v786, %v785
        %v806 = vpack.c.b16 %v788, %v787
        %v807 = vpack.c.b16 %v790, %v789
        %v808 = vpack.c.b16 %v792, %v791
        %825 = vmatprep.subr.bf16.mxu0 0
        %826 = vmatpush1.bf16.msra.mxu0 %v800
        %827 = vmatprep.subr.bf16.mxu0 0
        %828 = vmatpush1.bf16.msra.mxu0 %v799
        %829 = vmatprep.subr.bf16.mxu0 0
        %830 = vmatpush1.bf16.msra.mxu0 %v798
        %831 = vmatprep.subr.bf16.mxu0 0
        %832 = vmatpush1.bf16.msra.mxu0 %v797
        %833 = vmatprep.subr.bf16.mxu0 0
        %834 = vmatpush1.bf16.msra.mxu0 %v796
        %835 = vmatprep.subr.bf16.mxu0 0
        %836 = vmatpush1.bf16.msra.mxu0 %v795
        %837 = vmatprep.subr.bf16.mxu0 0
        %838 = vmatpush1.bf16.msra.mxu0 %v794
        %839 = vmatprep.subr.bf16.mxu0 0
        %840 = vmatpush1.bf16.msra.mxu0 %v793
        %841 = vmatprep.subr.bf16.mxu0 0
        %842 = vmatpush2.bf16.msra.mxu0 %v808
        %843 = vmatprep.subr.bf16.mxu0 0
        %844 = vmatpush2.bf16.msra.mxu0 %v807
        %845 = vmatprep.subr.bf16.mxu0 0
        %846 = vmatpush2.bf16.msra.mxu0 %v806
        %847 = vmatprep.subr.bf16.mxu0 0
        %848 = vmatpush2.bf16.msra.mxu0 %v805
        %849 = vmatprep.subr.bf16.mxu0 0
        %850 = vmatpush2.bf16.msra.mxu0 %v804
        %851 = vmatprep.subr.bf16.mxu0 0
        %852 = vmatpush2.bf16.msra.mxu0 %v803
        %853 = vmatprep.subr.bf16.mxu0 0
        %854 = vmatpush2.bf16.msra.mxu0 %v802
        %855 = vmatprep.subr.bf16.mxu0 0
        %856 = vmatpush2.bf16.msra.mxu0 %v801
        %857 = vmatprep.mubr.bf16.mxu0 %v690
        %858 = vmatmul.mubr.bf16.gmra.mxu0 %v689
        %v859 = vpop.f32.mrf.mxu0
        %v860 = vadd.f32 0.0, %v859
        %v861 = vpop.f32.mrf.mxu0
        %v862 = vpop.f32.mrf.mxu0
        %v863 = vadd.f32 0.0, %v862
        %v864 = vpop.f32.mrf.mxu0
        %865 = vmatprep.mubr.bf16.mxu0 %v692
        %866 = vmatmul.mubr.bf16.gmra.mxu0 %v691
        %v867 = vpop.f32.mrf.mxu0
        %v868 = vadd.f32 0.0, %v867
        %v869 = vpop.f32.mrf.mxu0
        %v870 = vpop.f32.mrf.mxu0
        %v871 = vadd.f32 0.0, %v870
        %v872 = vpop.f32.mrf.mxu0
        %873 = vmatprep.mubr.bf16.mxu0 %v694
        %874 = vmatmul.mubr.bf16.gmra.mxu0 %v693
        %v875 = vpop.f32.mrf.mxu0
        %v876 = vadd.f32 0.0, %v875
        %v877 = vpop.f32.mrf.mxu0
        %v878 = vpop.f32.mrf.mxu0
        %v879 = vadd.f32 0.0, %v878
        %v880 = vpop.f32.mrf.mxu0
        %881 = vmatprep.mubr.bf16.mxu0 %v696
        %882 = vmatmul.mubr.bf16.gmra.mxu0 %v695
        %v883 = vpop.f32.mrf.mxu0
        %v884 = vadd.f32 0.0, %v883
        %v885 = vpop.f32.mrf.mxu0
        %v886 = vpop.f32.mrf.mxu0
        %v887 = vadd.f32 0.0, %v886
        %v888 = vpop.f32.mrf.mxu0
        %889 = vdwg.mxu0
        %v890 = vadd.f32 %v681, %v860
        %v891 = vadd.f32 %v682, %v863
        %v892 = vadd.f32 %v683, %v868
        %v893 = vadd.f32 %v684, %v871
        %v894 = vadd.f32 %v685, %v876
        %v895 = vadd.f32 %v686, %v879
        %v896 = vadd.f32 %v687, %v884
        %v897 = vadd.f32 %v688, %v887
        %898 = vst [vmem:[#allocation3] sm:$0xff] %v890
        %899 = vst [vmem:[#allocation3 + $0x8] sm:$0xff] %v891
        %900 = vst [vmem:[#allocation3 + $0x10] sm:$0xff] %v892
        %901 = vst [vmem:[#allocation3 + $0x18] sm:$0xff] %v893
        %902 = vst [vmem:[#allocation3 + $0x20] sm:$0xff] %v894
        %903 = vst [vmem:[#allocation3 + $0x28] sm:$0xff] %v895
        %904 = vst [vmem:[#allocation3 + $0x30] sm:$0xff] %v896
        %905 = vst [vmem:[#allocation3 + $0x38] sm:$0xff] %v897
        // Predicated region
        $region57: #{tpu_custom_call.1} parent=39 // pred_check
          %p906 = pneg %p389
        $region58: #{tpu_custom_call.1} parent=39 // pred_check_branch
          %908 = sbr.rel (%p906) target = $region60
        $region59: #{tpu_custom_call.1} parent=39 // pred_region
          %v909 = vld [vmem:[#allocation3] sm:$0xff]
          %v910 = vld [vmem:[#allocation3 + $0x8] sm:$0xff]
          %v911 = vld [vmem:[#allocation3 + $0x10] sm:$0xff]
          %v912 = vld [vmem:[#allocation3 + $0x18] sm:$0xff]
          %v913 = vld [vmem:[#allocation3 + $0x20] sm:$0xff]
          %v914 = vld [vmem:[#allocation3 + $0x28] sm:$0xff]
          %v915 = vld [vmem:[#allocation3 + $0x30] sm:$0xff]
          %v916 = vld [vmem:[#allocation3 + $0x38] sm:$0xff]
          %v917 = vld [vmem:[%s380] sm:$0x1]
          %v918 = vlaneseq
          %v919 = vshrl.u32 %v918, 7
          %v920 = vsub.s32 0, %v919
          %v921 = vrot.slane %v917, %v920
          %v922 = vadd.f32 %v909, %v921
          %v923 = vadd.f32 %v910, %v921
          %v924 = vadd.f32 %v911, %v921
          %v925 = vadd.f32 %v912, %v921
          %v926 = vadd.f32 %v913, %v921
          %v927 = vadd.f32 %v914, %v921
          %v928 = vadd.f32 %v915, %v921
          %v929 = vadd.f32 %v916, %v921
          %v930 = vadd.f32 %v922, %v472
          %v931 = vadd.f32 %v923, %v473
          %v932 = vadd.f32 %v924, %v474
          %v933 = vadd.f32 %v925, %v475
          %v934 = vadd.f32 %v926, %v476
          %v935 = vadd.f32 %v927, %v477
          %v936 = vadd.f32 %v928, %v478
          %v937 = vadd.f32 %v929, %v479
          %938 = vadd.xlane.f32.xlu0 %v930
          %v939 = vpop.xlane.xlu0 %938
          %940 = vadd.xlane.f32.xlu0 %v931
          %v941 = vpop.xlane.xlu0 %940
          %942 = vadd.xlane.f32.xlu0 %v932
          %v943 = vpop.xlane.xlu0 %942
          %944 = vadd.xlane.f32.xlu0 %v933
          %v945 = vpop.xlane.xlu0 %944
          %946 = vadd.xlane.f32.xlu0 %v934
          %v947 = vpop.xlane.xlu0 %946
          %948 = vadd.xlane.f32.xlu0 %v935
          %v949 = vpop.xlane.xlu0 %948
          %950 = vadd.xlane.f32.xlu0 %v936
          %v951 = vpop.xlane.xlu0 %950
          %952 = vadd.xlane.f32.xlu0 %v937
          %v953 = vpop.xlane.xlu0 %952
          %v954 = vrcp.pop 128.0
          %v955 = vmul.f32 %v939, %v954
          %v956 = vmul.f32 %v941, %v954
          %v957 = vmul.f32 %v943, %v954
          %v958 = vmul.f32 %v945, %v954
          %v959 = vmul.f32 %v947, %v954
          %v960 = vmul.f32 %v949, %v954
          %v961 = vmul.f32 %v951, %v954
          %v962 = vmul.f32 %v953, %v954
          %v963 = vsub.f32 %v930, %v955
          %v964 = vsub.f32 %v931, %v956
          %v965 = vsub.f32 %v932, %v957
          %v966 = vsub.f32 %v933, %v958
          %v967 = vsub.f32 %v934, %v959
          %v968 = vsub.f32 %v935, %v960
          %v969 = vsub.f32 %v936, %v961
          %v970 = vsub.f32 %v937, %v962
          %v971 = vmul.f32 %v963, %v963
          %v972 = vmul.f32 %v964, %v964
          %v973 = vmul.f32 %v965, %v965
          %v974 = vmul.f32 %v966, %v966
          %v975 = vmul.f32 %v967, %v967
          %v976 = vmul.f32 %v968, %v968
          %v977 = vmul.f32 %v969, %v969
          %v978 = vmul.f32 %v970, %v970
          %979 = vadd.xlane.f32.xlu0 %v971
          %v980 = vpop.xlane.xlu0 %979
          %981 = vadd.xlane.f32.xlu0 %v972
          %v982 = vpop.xlane.xlu0 %981
          %983 = vadd.xlane.f32.xlu0 %v973
          %v984 = vpop.xlane.xlu0 %983
          %985 = vadd.xlane.f32.xlu0 %v974
          %v986 = vpop.xlane.xlu0 %985
          %987 = vadd.xlane.f32.xlu0 %v975
          %v988 = vpop.xlane.xlu0 %987
          %989 = vadd.xlane.f32.xlu0 %v976
          %v990 = vpop.xlane.xlu0 %989
          %991 = vadd.xlane.f32.xlu0 %v977
          %v992 = vpop.xlane.xlu0 %991
          %993 = vadd.xlane.f32.xlu0 %v978
          %v994 = vpop.xlane.xlu0 %993
          %v995 = vmul.f32 %v980, %v954
          %v996 = vmul.f32 %v982, %v954
          %v997 = vmul.f32 %v984, %v954
          %v998 = vmul.f32 %v986, %v954
          %v999 = vmul.f32 %v988, %v954
          %v1000 = vmul.f32 %v990, %v954
          %v1001 = vmul.f32 %v992, %v954
          %v1002 = vmul.f32 %v994, %v954
          %v1003 = vadd.f32 %v995, 1e-06
          %v1004 = vadd.f32 %v996, 1e-06
          %v1005 = vadd.f32 %v997, 1e-06
          %v1006 = vadd.f32 %v998, 1e-06
          %v1007 = vadd.f32 %v999, 1e-06
          %v1008 = vadd.f32 %v1000, 1e-06
          %v1009 = vadd.f32 %v1001, 1e-06
          %v1010 = vadd.f32 %v1002, 1e-06
          %v1011 = vrsqrt.pop %v1003
          %v1012 = vrsqrt.pop %v1004
          %v1013 = vrsqrt.pop %v1005
          %v1014 = vrsqrt.pop %v1006
          %v1015 = vrsqrt.pop %v1007
          %v1016 = vrsqrt.pop %v1008
          %v1017 = vrsqrt.pop %v1009
          %v1018 = vrsqrt.pop %v1010
          %v1019 = vmul.f32 %v963, %v1011
          %v1020 = vmul.f32 %v964, %v1012
          %v1021 = vmul.f32 %v965, %v1013
          %v1022 = vmul.f32 %v966, %v1014
          %v1023 = vmul.f32 %v967, %v1015
          %v1024 = vmul.f32 %v968, %v1016
          %v1025 = vmul.f32 %v969, %v1017
          %v1026 = vmul.f32 %v970, %v1018
          %v1027 = vld [vmem:[%s380 + $0x1] sm:$0x1]
          %v1028 = vlaneseq
          %v1029 = vshrl.u32 %v1028, 7
          %v1030 = vsub.s32 0, %v1029
          %v1031 = vrot.slane %v1027, %v1030
          %v1032 = vmul.f32 %v1019, %v1031
          %v1033 = vmul.f32 %v1020, %v1031
          %v1034 = vmul.f32 %v1021, %v1031
          %v1035 = vmul.f32 %v1022, %v1031
          %v1036 = vmul.f32 %v1023, %v1031
          %v1037 = vmul.f32 %v1024, %v1031
          %v1038 = vmul.f32 %v1025, %v1031
          %v1039 = vmul.f32 %v1026, %v1031
          %v1040 = vld [vmem:[%s380 + $0x2] sm:$0x1]
          %v1041 = vlaneseq
          %v1042 = vshrl.u32 %v1041, 7
          %v1043 = vsub.s32 0, %v1042
          %v1044 = vrot.slane %v1040, %v1043
          %v1045 = vadd.f32 %v1032, %v1044
          %v1046 = vadd.f32 %v1033, %v1044
          %v1047 = vadd.f32 %v1034, %v1044
          %v1048 = vadd.f32 %v1035, %v1044
          %v1049 = vadd.f32 %v1036, %v1044
          %v1050 = vadd.f32 %v1037, %v1044
          %v1051 = vadd.f32 %v1038, %v1044
          %v1052 = vadd.f32 %v1039, %v1044
          %1053 = vst [vmem:[#allocation2] sm:$0xff] %v1045
          %1054 = vst [vmem:[#allocation2 + $0x8] sm:$0xff] %v1046
          %1055 = vst [vmem:[#allocation2 + $0x10] sm:$0xff] %v1047
          %1056 = vst [vmem:[#allocation2 + $0x18] sm:$0xff] %v1048
          %1057 = vst [vmem:[#allocation2 + $0x20] sm:$0xff] %v1049
          %1058 = vst [vmem:[#allocation2 + $0x28] sm:$0xff] %v1050
          %1059 = vst [vmem:[#allocation2 + $0x30] sm:$0xff] %v1051
          %1060 = vst [vmem:[#allocation2 + $0x38] sm:$0xff] %v1052
        $region60: #{tpu_custom_call.1} parent=39 // pred_fallthru
          _
        %p1061 = scmp.eq.s32.totalorder %s28, 1
        %p1062 = pnand %p1061, %p389
        %p1063 = pneg %p1062
        // Predicated region
        $region61: #{tpu_custom_call.1} parent=39 // pred_check
          _
        $region62: #{tpu_custom_call.1} parent=39 // pred_check_branch
          %1065 = sbr.rel (%p1062) target = $region64
        $region63: #{tpu_custom_call.1} parent=39 // pred_region
          %v1066 = vld [vmem:[#allocation2] sm:$0xff]
          %v1067 = vld [vmem:[#allocation2 + $0x8] sm:$0xff]
          %v1068 = vld [vmem:[#allocation2 + $0x10] sm:$0xff]
          %v1069 = vld [vmem:[#allocation2 + $0x18] sm:$0xff]
          %v1070 = vld [vmem:[#allocation2 + $0x20] sm:$0xff]
          %v1071 = vld [vmem:[#allocation2 + $0x28] sm:$0xff]
          %v1072 = vld [vmem:[#allocation2 + $0x30] sm:$0xff]
          %v1073 = vld [vmem:[#allocation2 + $0x38] sm:$0xff]
          %1074 = vadd.xlane.f32.xlu0 %v1066
          %v1075 = vpop.xlane.xlu0 %1074
          %1076 = vadd.xlane.f32.xlu0 %v1067
          %v1077 = vpop.xlane.xlu0 %1076
          %1078 = vadd.xlane.f32.xlu0 %v1068
          %v1079 = vpop.xlane.xlu0 %1078
          %1080 = vadd.xlane.f32.xlu0 %v1069
          %v1081 = vpop.xlane.xlu0 %1080
          %1082 = vadd.xlane.f32.xlu0 %v1070
          %v1083 = vpop.xlane.xlu0 %1082
          %1084 = vadd.xlane.f32.xlu0 %v1071
          %v1085 = vpop.xlane.xlu0 %1084
          %1086 = vadd.xlane.f32.xlu0 %v1072
          %v1087 = vpop.xlane.xlu0 %1086
          %1088 = vadd.xlane.f32.xlu0 %v1073
          %v1089 = vpop.xlane.xlu0 %1088
          %vm1090 = vcmask 7168
          %1091 = vst.msk [vmem:[%s385] sm:$0xff] %vm1090, %v1075
          %1092 = vst.msk [vmem:[%s385 + $0x8] sm:$0xff] %vm1090, %v1077
          %1093 = vst.msk [vmem:[%s385 + $0x10] sm:$0xff] %vm1090, %v1079
          %1094 = vst.msk [vmem:[%s385 + $0x18] sm:$0xff] %vm1090, %v1081
          %1095 = vst.msk [vmem:[%s385 + $0x20] sm:$0xff] %vm1090, %v1083
          %1096 = vst.msk [vmem:[%s385 + $0x28] sm:$0xff] %vm1090, %v1085
          %1097 = vst.msk [vmem:[%s385 + $0x30] sm:$0xff] %vm1090, %v1087
          %1098 = vst.msk [vmem:[%s385 + $0x38] sm:$0xff] %vm1090, %v1089
        $region64: #{tpu_custom_call.1} parent=39 // pred_fallthru
          _
        %s1099 = smul.u32 8, %s27
        %p1100 = scmp.lt.s32.totalorder %s1099, 7
        %s1101 = scalar_select %p1100, %s1099, 7
        %s1102 = smul.addr %s1101, 8
        %s1103 = scalar_lea.vmem %s5, %s1102
        // Predicated region
        $region65: #{tpu_custom_call.1} parent=39 // pred_check
          %p1104 = pneg %p195
        $region66: #{tpu_custom_call.1} parent=39 // pred_check_branch
          %1106 = sbr.rel (%p1104) target = $region68
        $region67: #{tpu_custom_call.1} parent=39 // pred_region
          %s1107 = smul.u32 8, %s27
        $region68: #{tpu_custom_call.1} parent=39 // pred_fallthru
          _
        // Predicated region
        $region69: #{tpu_custom_call.1} parent=39 // pred_check
          %p1108 = pneg %p195
        $region70: #{tpu_custom_call.1} parent=39 // pred_check_branch
          %1110 = sbr.rel (%p1108) target = $region72
        $region71: #{tpu_custom_call.1} parent=39 // pred_region
          %s1111 = smul.u32 8, %s27
          %p1112 = scmp.lt.s32.totalorder %s1111, 7
          %s1113 = scalar_select %p1112, %s1111, 7
          %s1114 = smul.addr %s1113, 8
          %s1115 = scalar_lea.vmem %s5, %s1114
        $region72: #{tpu_custom_call.1} parent=39 // pred_fallthru
          _
      $region40: #{tpu_custom_call.1} parent=5 // pred_fallthru
        _
      %p1116 = scmp.le.s32.totalorder 2, %s17
      // Predicated region
      $region73: #{tpu_custom_call.1} parent=5 // pred_check
        %p1117 = pneg %p1116
      $region74: #{tpu_custom_call.1} parent=5 // pred_check_branch
        %1119 = sbr.rel (%p1117) target = $region76
      $region75: #{tpu_custom_call.1} parent=5 // pred_region
        %s1120 = ssub.s32 %s17, 2
      $region76: #{tpu_custom_call.1} parent=5 // pred_fallthru
        _
    $region6: #{tpu_custom_call.1} parent=1 // loop_footer
      %s21 = sadd.s32 1, %s17
    $region7: #{tpu_custom_call.1} parent=1 // loop_footer_branch
      %16 = sbr.rel target = $region3
    $region8: #{tpu_custom_call.1} parent=1 // loop_exit
      _
    %1121 = vsyncpa [#allocation5], 1
    %s1122 = scalar_lea.sflag [#allocation5], 1
    %1123 = vsyncpa %s1122, 1
    %1124 = vsyncpa [#allocation7], 1
    %s1125 = scalar_lea.sflag [#allocation7], 1
    %1126 = vsyncpa %s1125, 1

</llo_original>
